<compile_context>
chip_gen: v7x
topology: tpu7x:2x2x1
jax: 0.10.0
libtpu: 0.0.40
codegen_flags: <defaults>
</compile_context>

<pallas_src>
import functools

import jax
import jax.numpy as jnp
from jax.experimental import pallas as pl
from jax.experimental.pallas import tpu as pltpu


def _round_up(x, m):
    return ((x + m - 1) // m) * m


def _cdiv(a, b):
    return (a + b - 1) // b


def _query_vmem_capacity_bytes():
    """Physical VMEM per TensorCore (128 MiB v5e/v6e, 64 MiB v7x)."""
    try:
        cap = int(pltpu.get_tpu_info().vmem_capacity_bytes)
        if cap > 0:
            return cap
    except Exception:
        pass
    return 64 * 1024 * 1024  # conservative fallback (v7x per-core VMEM)


_VMEM_CAPACITY = _query_vmem_capacity_bytes()
# Scoped-VMEM limit handed to Mosaic: ~96 MiB on v5e/v6e, ~48 MiB on v7x.
_VMEM_LIMIT = min((_VMEM_CAPACITY * 3) // 4, 100 * 1024 * 1024)
# Fraction of the limit the tile-sizing formula may spend (headroom for the
# double-buffered output tiles, weights and compiler-managed temporaries).
_TILE_BUDGET = int(_VMEM_LIMIT * 0.8)


def _ce2d_kernel(logits_ref, targets_ref, weight_ref, out_ref, *, has_pad):
    """One grid step = one batch element x one (C, TP) tile of pixels.

    logits_ref : (C, TP)   logits (any float dtype; math in f32)
    targets_ref: (1, TP)   int32 class index per pixel (-1 == padding lane)
    weight_ref : (C, 1)    f32 per-class weights
    out_ref    : (8, 128)  f32 per-block partials:
                   [0, 0] = sum_i w[t_i] * (-log_softmax(x_i)[t_i])
                   [0, 1] = sum_i w[t_i]           (rest zero)
    """
    x = logits_ref[...].astype(jnp.float32)                 # (C, TP)
    t_raw = targets_ref[...]                                 # (1, TP) int32

    # targets[targets == 255] = 0   (module semantics); the -1 pad sentinel
    # stays -1 so the class-select mask below never matches a padded lane.
    t = jnp.where(t_raw == 255, 0, t_raw)

    # Numerically-stable log-sum-exp along the class (sublane) axis; purely
    # per-lane, so garbage in out-of-bounds lanes of a partial block cannot
    # contaminate valid lanes.
    m = jnp.max(x, axis=0, keepdims=True)                    # (1, TP)
    s = jnp.sum(jnp.exp(x - m), axis=0, keepdims=True)       # (1, TP)

    # Gather x[t] and weight[t] with one boolean class mask (no one-hot, no
    # materialized log-softmax).
    cls = jax.lax.broadcasted_iota(jnp.int32, x.shape, 0)    # (C, TP)
    sel = cls == t                                           # (C, TP) bool
    x_t = jnp.sum(jnp.where(sel, x, 0.0), axis=0, keepdims=True)            # (1, TP)
    w_t = jnp.sum(jnp.where(sel, weight_ref[...], 0.0), axis=0, keepdims=True)

    nll = jnp.log(s) + m - x_t                               # (1, TP) = -log p[t]
    terms = w_t * nll                                        # (1, TP)
    if has_pad:
        # Padded / OOB lanes read uninitialized VMEM logits (possibly NaN).
        # w_t is already 0 there (sel never matches t == -1), but 0 * NaN is
        # NaN, so the final per-pixel contribution must be masked.
        terms = jnp.where(t_raw != -1, terms, 0.0)

    loss_part = jnp.sum(terms)                               # scalar
    w_part = jnp.sum(w_t)                                    # scalar (pads give 0)

    # Pack the two scalars into a lane/sublane-aligned (8, 128) output tile.
    row = jax.lax.broadcasted_iota(jnp.int32, (8, 128), 0)
    lane = jax.lax.broadcasted_iota(jnp.int32, (8, 128), 1)
    out_ref[...] = jnp.where(
        (row == 0) & (lane == 0), loss_part,
        jnp.where((row == 0) & (lane == 1), w_part, 0.0))


def _pick_tile(C, N, hw, in_dtype, tile_p):
    """Largest 128-multiple pixel tile whose working set fits the VMEM budget."""
    in_dsize = jnp.dtype(in_dtype).itemsize
    pack = max(1, 4 // in_dsize)                 # sublane packing: f32->1, bf16->2
    c_pad_in = _round_up(C, 8 * pack)            # physical sublanes of input tile
    c_pad_f32 = _round_up(C, 8)                  # physical sublanes of f32 temps

    bytes_per_lane = (
        2 * c_pad_in * in_dsize                  # double-buffered logits block
        + 2 * 8 * 4                              # double-buffered (1,tp) int32 targets (8 phys sublanes)
        + 3 * c_pad_f32 * 4                      # f32 upcast + exp/select temporaries
    )
    tp = max(128, (_TILE_BUDGET // bytes_per_lane) // 128 * 128)
    tp = min(tp, _round_up(hw, 128))
    if tile_p is not None:
        tp = max(128, min(tp, _round_up(tile_p, 128)))

    # Keep >= ~4 grid steps so v7x's two TensorCores both get work and the
    # DMA/compute pipeline has something to overlap.
    while tp > 128 and N * _cdiv(hw, tp) < 4:
        tp = max(128, _round_up(tp // 2, 128))
    return tp


@functools.partial(jax.jit, static_argnames=("tile_p",))
def cross_entropy_loss_2d(outputs, targets, weight=None, *, tile_p=None):
    """Weighted 2D cross-entropy (== NLLLoss(log_softmax(outputs, 1), targets))."""
    N, C, H, W = outputs.shape
    hw = H * W

    if weight is None:
        weight = jnp.ones((C,), jnp.float32)
    w_col = weight.astype(jnp.float32).reshape(C, 1)

    tp = _pick_tile(C, N, hw, outputs.dtype, tile_p)
    num_pb = _cdiv(hw, tp)
    hw_pad = num_pb * tp
    has_pad = hw_pad != hw

    # NCHW -> (N, C, H*W): contiguous, no transpose, no extra HBM pass.
    logits = outputs.reshape(N, C, hw)

    t = targets.reshape(N, 1, hw).astype(jnp.int32)
    if has_pad:
        # Only the (cheap, int32) targets get padded; padded lanes carry -1.
        t = jnp.pad(t, ((0, 0), (0, 0), (0, hw_pad - hw)), constant_values=-1)

    kernel = functools.partial(_ce2d_kernel, has_pad=has_pad)

    partials = pl.pallas_call(
        kernel,
        out_shape=jax.ShapeDtypeStruct((N, num_pb, 8, 128), jnp.float32),
        grid_spec=pltpu.PrefetchScalarGridSpec(
            num_scalar_prefetch=0,
            grid=(N, num_pb),
            in_specs=[
                # logits: the trailing partial block (if any) is handled by the
                # per-pixel mask inside the kernel.
                pl.BlockSpec((None, C, tp), lambda n, p: (n, 0, p)),
                pl.BlockSpec((None, 1, tp), lambda n, p: (n, 0, p)),
                pl.BlockSpec((C, 1), lambda n, p: (0, 0)),
            ],
            out_specs=pl.BlockSpec((None, None, 8, 128),
                                   lambda n, p: (n, p, 0, 0)),
        ),
        compiler_params=pltpu.CompilerParams(
            dimension_semantics=("parallel", "parallel"),
            vmem_limit_bytes=int(_VMEM_LIMIT)),
    )(logits, t, w_col)

    # Single fused pass over the tiny per-block partials; lanes 0/1 of the
    # result carry the loss and weight sums.
    sums = jnp.sum(partials, axis=(0, 1, 2))                 # (128,) f32
    return sums[0] / sums[1]


def _reference_loss(outputs, targets, weight):
    """Pure-JAX reference mirroring the PyTorch module."""
    targets = jnp.where(targets == 255, 0, targets)
    logp = jax.nn.log_softmax(outputs.astype(jnp.float32), axis=1)   # (N,C,H,W)
    picked = jnp.take_along_axis(logp, targets[:, None, :, :], axis=1)[:, 0]
    w = weight[targets]
    return jnp.sum(-picked * w) / jnp.sum(w)


if __name__ == "__main__":
    key = jax.random.PRNGKey(0)
    k1, k2, k3, k4, k5 = jax.random.split(key, 5)

    # Case 1: divisible spatial size (no padding path).
    N, C, H, W = 2, 4, 16, 16
    outputs = jax.random.normal(k1, (N, C, H, W), dtype=jnp.float32)
    targets = jax.random.randint(k2, (N, H, W), 0, C, dtype=jnp.int32)
    ignore_mask = jax.random.uniform(k3, (N, H, W)) < 0.1
    targets = jnp.where(ignore_mask, 255, targets)
    weight = (jnp.arange(C, dtype=jnp.float32) + 1.0) / C

    loss = jax.block_until_ready(cross_entropy_loss_2d(outputs, targets, weight))
    ref = _reference_loss(outputs, targets, weight)
    assert jnp.allclose(loss, ref, rtol=1e-5, atol=1e-5), (loss, ref)

    # Case 2: non-divisible spatial size (exercises the padded/masked path).
    N2, C2, H2, W2 = 1, 5, 7, 9
    outputs2 = jax.random.normal(k4, (N2, C2, H2, W2), dtype=jnp.float32)
    targets2 = jax.random.randint(k5, (N2, H2, W2), 0, C2, dtype=jnp.int32)
    weight2 = (jnp.arange(C2, dtype=jnp.float32) + 1.0) / C2

    loss2 = jax.block_until_ready(cross_entropy_loss_2d(outputs2, targets2, weight2))
    ref2 = _reference_loss(outputs2, targets2, weight2)
    assert jnp.allclose(loss2, ref2, rtol=1e-5, atol=1e-5), (loss2, ref2)

    print("KERNEL_OK")
</pallas_src>

<mosaic_0001>
module attributes {stable_mosaic.version = 11 : i64} {
  func.func @_ce2d_kernel(%arg0: i32, %arg1: i32, %arg2: memref<1x4x128xf32, #tpu.memory_space<vmem>>, %arg3: memref<1x1x128xi32, #tpu.memory_space<vmem>>, %arg4: memref<4x1xf32, #tpu.memory_space<vmem>>, %arg5: memref<1x1x8x128xf32, #tpu.memory_space<vmem>>) attributes {dimension_semantics = [#tpu.dimension_semantics<parallel>, #tpu.dimension_semantics<parallel>], iteration_bounds = array<i64: 2, 2>, scalar_prefetch = 0 : i64, scratch_operands = 0 : i64, tpu.core_type = #tpu.core_type<tc>, window_params = [{transform_indices = @transform_0, window_bounds = array<i64: 1, 4, 128>}, {transform_indices = @transform_1, window_bounds = array<i64: 1, 1, 128>}, {pipeline_mode = #tpu.pipeline_mode<synchronous>, transform_indices = @transform_2, window_bounds = array<i64: 4, 1>}, {transform_indices = @transform_3, window_bounds = array<i64: 1, 1, 8, 128>}]} {
    %c0 = arith.constant 0 : index
    %c0_0 = arith.constant 0 : index
    %c0_1 = arith.constant 0 : index
    %0 = vector.load %arg2[%c0, %c0_0, %c0_1] : memref<1x4x128xf32, #tpu.memory_space<vmem>>, vector<1x4x128xf32>
    %1 = vector.shape_cast %0 : vector<1x4x128xf32> to vector<4x128xf32>
    %c0_2 = arith.constant 0 : index
    %c0_3 = arith.constant 0 : index
    %c0_4 = arith.constant 0 : index
    %2 = vector.load %arg3[%c0_2, %c0_3, %c0_4] : memref<1x1x128xi32, #tpu.memory_space<vmem>>, vector<1x1x128xi32>
    %3 = vector.shape_cast %2 : vector<1x1x128xi32> to vector<1x128xi32>
    %c255_i32 = arith.constant 255 : i32
    %4 = vector.broadcast %c255_i32 : i32 to vector<1x128xi32>
    %5 = arith.cmpi eq, %3, %4 : vector<1x128xi32>
    %c0_i32 = arith.constant 0 : i32
    %6 = vector.broadcast %c0_i32 : i32 to vector<1x128xi32>
    %7 = arith.select %5, %6, %3 : vector<1x128xi1>, vector<1x128xi32>
    %cst = arith.constant dense<0xFF800000> : vector<128xf32>
    %8 = vector.multi_reduction <maximumf>, %1, %cst [0] : vector<4x128xf32> to vector<128xf32>
    %9 = vector.shape_cast %8 : vector<128xf32> to vector<1x128xf32>
    %10 = vector.broadcast %9 : vector<1x128xf32> to vector<4x128xf32>
    %11 = arith.subf %1, %10 : vector<4x128xf32>
    %12 = math.exp %11 : vector<4x128xf32>
    %cst_5 = arith.constant dense<0.000000e+00> : vector<128xf32>
    %13 = vector.multi_reduction <add>, %12, %cst_5 [0] : vector<4x128xf32> to vector<128xf32>
    %14 = vector.shape_cast %13 : vector<128xf32> to vector<1x128xf32>
    %15 = tpu.iota {dimensions = array<i32: 0>} : vector<4x128xi32>
    %16 = vector.broadcast %7 : vector<1x128xi32> to vector<4x128xi32>
    %17 = arith.cmpi eq, %15, %16 : vector<4x128xi32>
    %cst_6 = arith.constant 0.000000e+00 : f32
    %18 = vector.broadcast %cst_6 : f32 to vector<4x128xf32>
    %19 = arith.select %17, %1, %18 : vector<4x128xi1>, vector<4x128xf32>
    %cst_7 = arith.constant dense<0.000000e+00> : vector<128xf32>
    %20 = vector.multi_reduction <add>, %19, %cst_7 [0] : vector<4x128xf32> to vector<128xf32>
    %21 = vector.shape_cast %20 : vector<128xf32> to vector<1x128xf32>
    %c0_8 = arith.constant 0 : index
    %c0_9 = arith.constant 0 : index
    %22 = vector.load %arg4[%c0_8, %c0_9] : memref<4x1xf32, #tpu.memory_space<vmem>>, vector<4x1xf32>
    %cst_10 = arith.constant 0.000000e+00 : f32
    %23 = vector.shape_cast %22 : vector<4x1xf32> to vector<4x1xf32>
    %24 = vector.broadcast %23 : vector<4x1xf32> to vector<4x128xf32>
    %25 = vector.broadcast %cst_10 : f32 to vector<4x128xf32>
    %26 = arith.select %17, %24, %25 : vector<4x128xi1>, vector<4x128xf32>
    %cst_11 = arith.constant dense<0.000000e+00> : vector<128xf32>
    %27 = vector.multi_reduction <add>, %26, %cst_11 [0] : vector<4x128xf32> to vector<128xf32>
    %28 = vector.shape_cast %27 : vector<128xf32> to vector<1x128xf32>
    %29 = math.log %14 : vector<1x128xf32>
    %30 = arith.addf %29, %9 : vector<1x128xf32>
    %31 = arith.subf %30, %21 : vector<1x128xf32>
    %32 = arith.mulf %28, %31 : vector<1x128xf32>
    %33 = vector.shape_cast %32 : vector<1x128xf32> to vector<1x1x128xf32>
    %cst_12 = arith.constant dense<0.000000e+00> : vector<1xf32>
    %34 = vector.multi_reduction <add>, %33, %cst_12 [1, 2] : vector<1x1x128xf32> to vector<1xf32>
    %35 = vector.shape_cast %34 : vector<1xf32> to vector<1x1x1xf32>
    %36 = vector.extract %35[0, 0, 0] : f32 from vector<1x1x1xf32>
    %37 = vector.shape_cast %28 : vector<1x128xf32> to vector<1x1x128xf32>
    %cst_13 = arith.constant dense<0.000000e+00> : vector<1xf32>
    %38 = vector.multi_reduction <add>, %37, %cst_13 [1, 2] : vector<1x1x128xf32> to vector<1xf32>
    %39 = vector.shape_cast %38 : vector<1xf32> to vector<1x1x1xf32>
    %40 = vector.extract %39[0, 0, 0] : f32 from vector<1x1x1xf32>
    %41 = tpu.iota {dimensions = array<i32: 0>} : vector<8x128xi32>
    %42 = tpu.iota {dimensions = array<i32: 1>} : vector<8x128xi32>
    %c0_i32_14 = arith.constant 0 : i32
    %43 = vector.broadcast %c0_i32_14 : i32 to vector<8x128xi32>
    %44 = arith.cmpi eq, %41, %43 : vector<8x128xi32>
    %c0_i32_15 = arith.constant 0 : i32
    %45 = vector.broadcast %c0_i32_15 : i32 to vector<8x128xi32>
    %46 = arith.cmpi eq, %42, %45 : vector<8x128xi32>
    %47 = arith.andi %44, %46 : vector<8x128xi1>
    %c0_i32_16 = arith.constant 0 : i32
    %48 = vector.broadcast %c0_i32_16 : i32 to vector<8x128xi32>
    %49 = arith.cmpi eq, %41, %48 : vector<8x128xi32>
    %c1_i32 = arith.constant 1 : i32
    %50 = vector.broadcast %c1_i32 : i32 to vector<8x128xi32>
    %51 = arith.cmpi eq, %42, %50 : vector<8x128xi32>
    %52 = arith.andi %49, %51 : vector<8x128xi1>
    %cst_17 = arith.constant 0.000000e+00 : f32
    %53 = vector.broadcast %40 : f32 to vector<8x128xf32>
    %54 = vector.broadcast %cst_17 : f32 to vector<8x128xf32>
    %55 = arith.select %52, %53, %54 : vector<8x128xi1>, vector<8x128xf32>
    %56 = vector.broadcast %36 : f32 to vector<8x128xf32>
    %57 = arith.select %47, %56, %55 : vector<8x128xi1>, vector<8x128xf32>
    %c0_18 = arith.constant 0 : index
    %c0_19 = arith.constant 0 : index
    %c0_20 = arith.constant 0 : index
    %c0_21 = arith.constant 0 : index
    %58 = vector.load %arg5[%c0_18, %c0_19, %c0_20, %c0_21] : memref<1x1x8x128xf32, #tpu.memory_space<vmem>>, vector<1x1x8x128xf32>
    %59 = vector.shape_cast %58 : vector<1x1x8x128xf32> to vector<8x128xf32>
    %60 = vector.shape_cast %57 : vector<8x128xf32> to vector<1x1x8x128xf32>
    tpu.vector_store %arg5[%c0_18, %c0_19, %c0_20, %c0_21], %60 {strides = array<i32>} : memref<1x1x8x128xf32, #tpu.memory_space<vmem>>, vector<1x1x8x128xf32>,
    return
  }
  func.func @transform_0(%arg0: i32, %arg1: i32) -> (i32, i32, i32) {
    %c0_i32 = arith.constant 0 : i32
    %c0_i32_0 = arith.constant 0 : i32
    return %arg0, %c0_i32, %arg1 : i32, i32, i32
  }
  func.func @transform_1(%arg0: i32, %arg1: i32) -> (i32, i32, i32) {
    %c0_i32 = arith.constant 0 : i32
    %c0_i32_0 = arith.constant 0 : i32
    return %arg0, %c0_i32, %arg1 : i32, i32, i32
  }
  func.func @transform_2(%arg0: i32, %arg1: i32) -> (i32, i32) {
    %c0_i32 = arith.constant 0 : i32
    %c0_i32_0 = arith.constant 0 : i32
    %c0_i32_1 = arith.constant 0 : i32
    return %c0_i32, %c0_i32_0 : i32, i32
  }
  func.func @transform_3(%arg0: i32, %arg1: i32) -> (i32, i32, i32, i32) {
    %c0_i32 = arith.constant 0 : i32
    %c0_i32_0 = arith.constant 0 : i32
    %c0_i32_1 = arith.constant 0 : i32
    return %arg0, %arg1, %c0_i32, %c0_i32_0 : i32, i32, i32, i32
  }
}

</mosaic_0001>

<llo_original>
// kernel: cross_entropy_loss_2d.1
$region0: #{cross_entropy_loss_2d.1}
  #allocation0 [shape = 'u32[]', space=smem, size = 0x4, offset = 0x4, fixed_abs, tag = 'smem constant byte address 0x4 - core index']
  #allocation1 [shape = 'u32[144,128]{1,0:T(1,128)}', space=vmem, size = 0x12000, scoped, tag = 'internal scratch']
  %s0 = inlined_call_operand.vmem [shape: f32[2,4,256], index: 0, kind: input, shape index: {}]
  %s1 = inlined_call_operand.vmem [shape: s32[2,1,256], index: 1, kind: input, shape index: {}]
  %s2 = inlined_call_operand.vmem [shape: f32[4,1], index: 2, kind: input, shape index: {}]
  %s3 = inlined_call_operand.vmem [shape: f32[2,2,8,128], index: 3, kind: output, shape index: {}]
  %s4 = sld [smem:[#allocation0]]
  $region45: #{cross_entropy_loss_2d.1} parent=0
    _
  %s6 = ssub.s32 1, %s4
  %s7 = scalar_select 0, %s6, %s4
  loop: start=0, step=1, limit=6
  $region2: #{cross_entropy_loss_2d.1} parent=0 // loop_pre_header
    _
  $region3: #{cross_entropy_loss_2d.1} parent=0 // loop_header
    %s9 = sphi 0, %s13
    %p10 = scmp.ge.s32.totalorder %s9, 6
    %s16 = sphi 0, %s28
    %s17 = sphi 0, %s24
    %s18 = sphi 0, %s16
    %s19 = sphi 0, %s17
    %s20 = sphi 0, %s18
    %s21 = sphi 0, %s19
    %s33 = sphi 0, %s35
    %s36 = sphi 0, %s33
    %s37 = sphi 0, %s36
    %s53 = sphi 0, %s37
    %s61 = sphi 0, %s63
    %s64 = sphi 0, %s61
    %s65 = sphi 0, %s64
    %s81 = sphi 0, %s65
    %s85 = sphi 0, %s85
    %s87 = sphi 0, %s85
    %s88 = sphi 0, %s87
    %s102 = sphi 0, %s88
    %s110 = sphi 0, %s112
    %s113 = sphi 0, %s110
    %s114 = sphi 0, %s113
    %s130 = sphi 0, %s114
  $region4: #{cross_entropy_loss_2d.1} parent=0 // loop_header_branch
    %12 = sbr.rel (%p10) target = $region8
  $region5: #{cross_entropy_loss_2d.1} parent=0 // loop_body
    %s14 = ssub.s32 %s9, 1
    %s15 = ssub.s32 %s9, 2
    %s22 = sadd.s32 1, %s17
    %p23 = scmp.ge.s32.totalorder %s22, 2
    %s24 = scalar_select %p23, 0, %s22
    %s25 = sadd.s32 1, %s16
    %s26 = scalar_select %p23, %s25, %s16
    %p27 = scmp.ge.s32.totalorder %s26, 2
    %s28 = scalar_select %p27, 0, %s26
    %s29 = ssub.s32 %s16, %s28
    %s30 = ssub.s32 %s17, %s24
    %s31 = sor.u32 %s29, %s30
    %p32 = scmp.eq.s32.totalorder %s31, 0
    %s34 = sadd.s32 %s33, 1
    %s35 = scalar_select %p32, %s33, %s34
    %p38 = pneg %p32
    %p39 = scmp.eq.s32.totalorder %s9, 3
    %p40 = por %p38, %p39
    %p41 = scmp.ne.s32.totalorder %s33, %s36
    %p42 = scmp.eq.s32.totalorder %s9, 0
    %p43 = por %p41, %p42
    %p44 = scmp.ne.s32.totalorder %s33, %s36
    %p45 = scmp.eq.s32.totalorder %s14, 3
    %p46 = por %p44, %p45
    %p47 = scmp.ne.s32.totalorder %s36, %s37
    %p48 = scmp.eq.s32.totalorder %s14, 0
    %p49 = por %p47, %p48
    %p50 = scmp.ne.s32.totalorder %s36, %s37
    %p51 = scmp.eq.s32.totalorder %s15, 3
    %p52 = por %p50, %p51
    %p54 = scmp.ne.s32.totalorder %s37, %s53
    %p55 = scmp.eq.s32.totalorder %s15, 0
    %p56 = por %p54, %p55
    %s57 = ssub.s32 %s16, %s28
    %s58 = ssub.s32 %s17, %s24
    %s59 = sor.u32 %s57, %s58
    %p60 = scmp.eq.s32.totalorder %s59, 0
    %s62 = sadd.s32 %s61, 1
    %s63 = scalar_select %p60, %s61, %s62
    %p66 = pneg %p60
    %p67 = scmp.eq.s32.totalorder %s9, 3
    %p68 = por %p66, %p67
    %p69 = scmp.ne.s32.totalorder %s61, %s64
    %p70 = scmp.eq.s32.totalorder %s9, 0
    %p71 = por %p69, %p70
    %p72 = scmp.ne.s32.totalorder %s61, %s64
    %p73 = scmp.eq.s32.totalorder %s14, 3
    %p74 = por %p72, %p73
    %p75 = scmp.ne.s32.totalorder %s64, %s65
    %p76 = scmp.eq.s32.totalorder %s14, 0
    %p77 = por %p75, %p76
    %p78 = scmp.ne.s32.totalorder %s64, %s65
    %p79 = scmp.eq.s32.totalorder %s15, 3
    %p80 = por %p78, %p79
    %p82 = scmp.ne.s32.totalorder %s65, %s81
    %p83 = scmp.eq.s32.totalorder %s15, 0
    %p84 = por %p82, %p83
    %s86 = sadd.s32 %s85, 1
    %p89 = scmp.eq.s32.totalorder %s9, 3
    %p90 = scmp.ne.s32.totalorder %s85, %s87
    %p91 = scmp.eq.s32.totalorder %s9, 0
    %p92 = por %p90, %p91
    %p93 = scmp.ne.s32.totalorder %s85, %s87
    %p94 = scmp.eq.s32.totalorder %s14, 3
    %p95 = por %p93, %p94
    %p96 = scmp.ne.s32.totalorder %s87, %s88
    %p97 = scmp.eq.s32.totalorder %s14, 0
    %p98 = por %p96, %p97
    %p99 = scmp.ne.s32.totalorder %s87, %s88
    %p100 = scmp.eq.s32.totalorder %s15, 3
    %p101 = por %p99, %p100
    %p103 = scmp.ne.s32.totalorder %s88, %s102
    %p104 = scmp.eq.s32.totalorder %s15, 0
    %p105 = por %p103, %p104
    %s106 = ssub.s32 %s16, %s28
    %s107 = ssub.s32 %s17, %s24
    %s108 = sor.u32 %s106, %s107
    %p109 = scmp.eq.s32.totalorder %s108, 0
    %s111 = sadd.s32 %s110, 1
    %s112 = scalar_select %p109, %s110, %s111
    %p115 = pneg %p109
    %p116 = scmp.eq.s32.totalorder %s9, 3
    %p117 = por %p115, %p116
    %p118 = scmp.ne.s32.totalorder %s110, %s113
    %p119 = scmp.eq.s32.totalorder %s9, 0
    %p120 = por %p118, %p119
    %p121 = scmp.ne.s32.totalorder %s110, %s113
    %p122 = scmp.eq.s32.totalorder %s14, 3
    %p123 = por %p121, %p122
    %p124 = scmp.ne.s32.totalorder %s113, %s114
    %p125 = scmp.eq.s32.totalorder %s14, 0
    %p126 = por %p124, %p125
    %p127 = scmp.ne.s32.totalorder %s113, %s114
    %p128 = scmp.eq.s32.totalorder %s15, 3
    %p129 = por %p127, %p128
    %p131 = scmp.ne.s32.totalorder %s114, %s130
    %p132 = scmp.eq.s32.totalorder %s15, 0
    %p133 = por %p131, %p132
    %p134 = scmp.le.s32.totalorder 1, %s9
    %p135 = scmp.lt.s32.totalorder %s9, 5
    %p136 = pnand %p134, %p135
    %p137 = pneg %p136
    // Predicated region
    $region9: #{cross_entropy_loss_2d.1} parent=5 // pred_check
      _
    $region10: #{cross_entropy_loss_2d.1} parent=5 // pred_check_branch
      %139 = sbr.rel (%p136) target = $region12
    $region11: #{cross_entropy_loss_2d.1} parent=5 // pred_region
      %s140 = ssub.s32 %s9, 1
      // Predicated region
      $region13: #{cross_entropy_loss_2d.1} parent=11 // pred_check
        %p141 = pneg %p98
      $region14: #{cross_entropy_loss_2d.1} parent=11 // pred_check_branch
        %143 = sbr.rel (%p141) target = $region16
      $region15: #{cross_entropy_loss_2d.1} parent=11 // pred_region
        _
      $region16: #{cross_entropy_loss_2d.1} parent=11 // pred_fallthru
        _
    $region12: #{cross_entropy_loss_2d.1} parent=5 // pred_fallthru
      _
    %p144 = scmp.lt.s32.totalorder %s9, 4
    // Predicated region
    $region17: #{cross_entropy_loss_2d.1} parent=5 // pred_check
      %p145 = pneg %p144
    $region18: #{cross_entropy_loss_2d.1} parent=5 // pred_check_branch
      %147 = sbr.rel (%p145) target = $region20
    $region19: #{cross_entropy_loss_2d.1} parent=5 // pred_region
      // Predicated region
      $region21: #{cross_entropy_loss_2d.1} parent=19 // pred_check
        %p148 = pneg %p43
      $region22: #{cross_entropy_loss_2d.1} parent=19 // pred_check_branch
        %150 = sbr.rel (%p148) target = $region24
      $region23: #{cross_entropy_loss_2d.1} parent=19 // pred_region
        %p151 = scmp.lt.s32.totalorder %s16, 1
        %s152 = scalar_select %p151, %s16, 1
        %p153 = scmp.lt.s32.totalorder %s17, 1
        %s154 = scalar_select %p153, %s17, 1
        %s155 = smul.addr %s152, 2
        %s156 = sadd.s32 %s154, %s155
        %s157 = smul.addr %s156, 4
        %s158 = scalar_lea.vmem %s0, %s157
      $region24: #{cross_entropy_loss_2d.1} parent=19 // pred_fallthru
        _
      // Predicated region
      $region25: #{cross_entropy_loss_2d.1} parent=19 // pred_check
        %p159 = pneg %p71
      $region26: #{cross_entropy_loss_2d.1} parent=19 // pred_check_branch
        %161 = sbr.rel (%p159) target = $region28
      $region27: #{cross_entropy_loss_2d.1} parent=19 // pred_region
        %p162 = scmp.lt.s32.totalorder %s16, 1
        %s163 = scalar_select %p162, %s16, 1
        %p164 = scmp.lt.s32.totalorder %s17, 1
        %s165 = scalar_select %p164, %s17, 1
        %s166 = smul.addr %s163, 2
        %s167 = sadd.s32 %s165, %s166
        %s168 = scalar_lea.vmem %s1, %s167
      $region28: #{cross_entropy_loss_2d.1} parent=19 // pred_fallthru
        _
    $region20: #{cross_entropy_loss_2d.1} parent=5 // pred_fallthru
      _
    %p169 = scmp.le.s32.totalorder 1, %s9
    %p170 = scmp.lt.s32.totalorder %s9, 5
    %p171 = pnand %p169, %p170
    %p172 = pneg %p171
    // Predicated region
    $region29: #{cross_entropy_loss_2d.1} parent=5 // pred_check
      _
    $region30: #{cross_entropy_loss_2d.1} parent=5 // pred_check_branch
      %174 = sbr.rel (%p171) target = $region32
    $region31: #{cross_entropy_loss_2d.1} parent=5 // pred_region
      %s175 = ssub.s32 %s9, 1
      %p176 = scmp.lt.s32.totalorder %s18, 1
      %s177 = scalar_select %p176, %s18, 1
      %p178 = scmp.lt.s32.totalorder %s19, 1
      %s179 = scalar_select %p178, %s19, 1
      %s180 = smul.addr %s177, 2
      %s181 = sadd.s32 %s179, %s180
      %s182 = smul.addr %s181, 4
      %s183 = scalar_lea.vmem %s0, %s182
      %p184 = pneg %p49
      %p185 = pneg %p46
      %p186 = scmp.lt.s32.totalorder %s18, 1
      %s187 = scalar_select %p186, %s18, 1
      %p188 = scmp.lt.s32.totalorder %s19, 1
      %s189 = scalar_select %p188, %s19, 1
      %s190 = smul.addr %s187, 2
      %s191 = sadd.s32 %s189, %s190
      %s192 = scalar_lea.vmem %s1, %s191
      %p193 = pneg %p77
      %p194 = pneg %p74
      %p195 = pneg %p98
      %p196 = pneg %p95
      %p197 = pneg %p126
      %p198 = pneg %p123
      %p199 = scmp.lt.s32.totalorder %s18, 1
      %s200 = scalar_select %p199, %s18, 1
      %p201 = scmp.lt.s32.totalorder %s19, 1
      %s202 = scalar_select %p201, %s19, 1
      %s203 = smul.addr %s200, 2
      %s204 = sadd.s32 %s202, %s203
      %s205 = smul.addr %s204, 8
      %s206 = scalar_lea.vmem %s3, %s205
      %p207 = scmp.lt.s32.totalorder %s18, 1
      %s208 = scalar_select %p207, %s18, 1
      %p209 = scmp.lt.s32.totalorder %s19, 1
      %s210 = scalar_select %p209, %s19, 1
      %s211 = smul.addr %s208, 2
      %s212 = sadd.s32 %s210, %s211
      %s213 = smul.addr %s212, 4
      %s214 = scalar_lea.vmem %s0, %s213
      %p215 = scmp.lt.s32.totalorder %s18, 1
      %s216 = scalar_select %p215, %s18, 1
      %p217 = scmp.lt.s32.totalorder %s19, 1
      %s218 = scalar_select %p217, %s19, 1
      %s219 = smul.addr %s216, 2
      %s220 = sadd.s32 %s218, %s219
      %s221 = scalar_lea.vmem %s1, %s220
      %p222 = scmp.lt.s32.totalorder %s18, 1
      %s223 = scalar_select %p222, %s18, 1
      %p224 = scmp.lt.s32.totalorder %s19, 1
      %s225 = scalar_select %p224, %s19, 1
      %s226 = smul.addr %s223, 2
      %s227 = sadd.s32 %s225, %s226
      %s228 = smul.addr %s227, 8
      %s229 = scalar_lea.vmem %s3, %s228
      %v230 = vld [vmem:[%s214] sm:$0xf]
      %v231 = vld [vmem:[%s221] sm:$0x1]
      %vm232 = vcmp.eq.s32.totalorder %v231, 255
      %v233 = vsel %vm232, 0, %v231
      %vm234 = vcmask 1043456
      %v235 = vsel %vm234, %v230, -inf
      %v236 = vrot.slane %v235, 4
      %v237 = vmax.f32 %v235, %v236
      %v238 = vrot.slane %v237, 2
      %v239 = vmax.f32 %v237, %v238
      %v240 = vrot.slane %v239, 1
      %v241 = vmax.f32 %v239, %v240
      %v242 = vsub.f32 %v230, %v241
      %v243 = vmul.f32 %v242, 1.442695
      %v244 = vpow.pop %v243
      %v245 = vsel %vm234, %v244, 0.0
      %v246 = vrot.slane %v245, 4
      %v247 = vadd.f32 %v245, %v246
      %v248 = vrot.slane %v247, 2
      %v249 = vadd.f32 %v247, %v248
      %v250 = vrot.slane %v249, 1
      %v251 = vadd.f32 %v249, %v250
      %v252 = vlaneseq
      %v253 = vshrl.u32 %v252, 7
      %v254 = vlaneseq
      %v255 = vshrl.u32 %v254, 7
      %v256 = vsub.s32 0, %v255
      %v257 = vrot.slane %v233, %v256
      %vm258 = vcmp.eq.s32.totalorder %v253, %v257
      %v259 = vsel %vm258, %v230, 0.0
      %v260 = vsel %vm234, %v259, 0.0
      %v261 = vrot.slane %v260, 4
      %v262 = vadd.f32 %v260, %v261
      %v263 = vrot.slane %v262, 2
      %v264 = vadd.f32 %v262, %v263
      %v265 = vrot.slane %v264, 1
      %v266 = vadd.f32 %v264, %v265
      %v267 = vld [vmem:[%s2] sm:$0xf]
      %269 = vset.pattern.permute.xlu0 0
      %270 = vperm.xlu0 %269, %v267
      %v271 = vpop.permute.xlu0 %270
      %v273 = vsel %vm258, %v271, 0.0
      %v274 = vsel %vm234, %v273, 0.0
      %v275 = vrot.slane %v274, 4
      %v276 = vadd.f32 %v274, %v275
      %v277 = vrot.slane %v276, 2
      %v278 = vadd.f32 %v276, %v277
      %v279 = vrot.slane %v278, 1
      %v280 = vadd.f32 %v278, %v279
      %v281 = vlog2.pop %v251
      %v282 = vmul.f32 %v281, 0.6931472
      %v283 = vadd.f32 %v282, %v241
      %v284 = vsub.f32 %v283, %v266
      %v285 = vmul.f32 %v280, %v284
      %vm286 = vcmask 1040384
      %v287 = vsel %vm286, %v285, 0.0
      %288 = vadd.xlane.f32.xlu0 %v287
      %v289 = vpop.xlane.xlu0 %288
      %v290 = vrot.slane %v289, 4
      %v291 = vadd.f32 %v289, %v290
      %v292 = vrot.slane %v291, 2
      %v293 = vadd.f32 %v291, %v292
      %v294 = vrot.slane %v293, 1
      %v295 = vadd.f32 %v293, %v294
      %s296 = vtos %v295
      %v297 = vsel %vm286, %v280, 0.0
      %298 = vadd.xlane.f32.xlu0 %v297
      %v299 = vpop.xlane.xlu0 %298
      %v300 = vrot.slane %v299, 4
      %v301 = vadd.f32 %v299, %v300
      %v302 = vrot.slane %v301, 2
      %v303 = vadd.f32 %v301, %v302
      %v304 = vrot.slane %v303, 1
      %v305 = vadd.f32 %v303, %v304
      %s306 = vtos %v305
      %v307 = vlaneseq
      %v308 = vand.u32 %v307, 127
      %vm309 = vcmp.eq.s32.totalorder %v253, 0
      %vm310 = vcmp.eq.s32.totalorder %v308, 0
      %vm311 = vmand %vm309, %vm310
      %vm312 = vcmp.eq.s32.totalorder %v308, 1
      %vm313 = vmand %vm309, %vm312
      %v314 = vstv %s306
      %v315 = vsel %vm313, %v314, 0.0
      %v316 = vstv %s296
      %v317 = vsel %vm311, %v316, %v315
      %318 = vst [vmem:[%s229] sm:$0xff] %v317
      %p319 = scmp.lt.s32.totalorder %s18, 1
      %s320 = scalar_select %p319, %s18, 1
      %p321 = scmp.lt.s32.totalorder %s19, 1
      %s322 = scalar_select %p321, %s19, 1
      %s323 = smul.addr %s320, 2
      %s324 = sadd.s32 %s322, %s323
      %s325 = smul.addr %s324, 8
      %s326 = scalar_lea.vmem %s3, %s325
      // Predicated region
      $region33: #{cross_entropy_loss_2d.1} parent=31 // pred_check
        %p327 = pneg %p123
      $region34: #{cross_entropy_loss_2d.1} parent=31 // pred_check_branch
        %329 = sbr.rel (%p327) target = $region36
      $region35: #{cross_entropy_loss_2d.1} parent=31 // pred_region
        _
      $region36: #{cross_entropy_loss_2d.1} parent=31 // pred_fallthru
        _
    $region32: #{cross_entropy_loss_2d.1} parent=5 // pred_fallthru
      _
    %p330 = scmp.le.s32.totalorder 2, %s9
    // Predicated region
    $region37: #{cross_entropy_loss_2d.1} parent=5 // pred_check
      %p331 = pneg %p330
    $region38: #{cross_entropy_loss_2d.1} parent=5 // pred_check_branch
      %333 = sbr.rel (%p331) target = $region40
    $region39: #{cross_entropy_loss_2d.1} parent=5 // pred_region
      %s334 = ssub.s32 %s9, 2
      // Predicated region
      $region41: #{cross_entropy_loss_2d.1} parent=39 // pred_check
        %p335 = pneg %p129
      $region42: #{cross_entropy_loss_2d.1} parent=39 // pred_check_branch
        %337 = sbr.rel (%p335) target = $region44
      $region43: #{cross_entropy_loss_2d.1} parent=39 // pred_region
        %p338 = scmp.lt.s32.totalorder %s20, 1
        %s339 = scalar_select %p338, %s20, 1
        %p340 = scmp.lt.s32.totalorder %s21, 1
        %s341 = scalar_select %p340, %s21, 1
        %s342 = smul.addr %s339, 2
        %s343 = sadd.s32 %s341, %s342
        %s344 = smul.addr %s343, 8
        %s345 = scalar_lea.vmem %s3, %s344
      $region44: #{cross_entropy_loss_2d.1} parent=39 // pred_fallthru
        _
    $region40: #{cross_entropy_loss_2d.1} parent=5 // pred_fallthru
      _
  $region6: #{cross_entropy_loss_2d.1} parent=0 // loop_footer
    %s13 = sadd.s32 1, %s9
  $region7: #{cross_entropy_loss_2d.1} parent=0 // loop_footer_branch
    %8 = sbr.rel target = $region3
  $region8: #{cross_entropy_loss_2d.1} parent=0 // loop_exit
    _

</llo_original>
